<compile_context>
chip_gen: v5e
topology: v5e:2x2
jax: 0.10.0
libtpu: 0.0.40
codegen_flags: <defaults>
</compile_context>

<pallas_src>
import jax
import jax.numpy as jnp
from jax.experimental import pallas as pl
from jax.experimental.pallas import tpu as pltpu

# ---- synthetic small configuration (original: deep_feat t,h,w = 112,12,25) ----
SEQ = 2              # seq_len (ConvLSTM batch dim; time length is 1 in DVNet4)
T = 8                # deep_feat_t == ConvLSTM input_dim == hidden_dim
FH, FW = 8, 16       # deep_feat_h, deep_feat_w  (FH*FW == 128 lanes)
HW = FH * FW
CIN = 2 * T          # full ConvLSTM conv input channels (x ++ h_prev) -- reference only
N_WASD, N_X, N_Y = 8, 16, 16
NH = N_WASD + N_X + N_Y        # 40 fused head outputs
NHP = 128                      # heads zero-padded to a lane-dense width
ALL = T * HW                   # flattened feature size fed to the fc heads (1024)
KTAP = 9 * T                   # conv-tap contraction rows (72)
KPAD = 80                      # KTAP + 1 bias row, padded to a bf16 (16,.)-tile multiple
GPAD = 32                      # 3*T gate rows padded to a bf16 (16,.)-tile multiple
SPAD = 8                       # SEQ padded to 8 sublanes for the head matmul / output


def _dvnet4_kernel(taps_ref, wconv_ref, wh_ref, bh_ref, out_ref, hbuf_ref):
    # ---- ConvLSTM cell, single step, zero initial (h, c): one fused matmul ----
    # (32, 80) bf16 @ (80, 256) bf16 -> (32, 256) f32; conv bias folded into K.
    gates = jnp.dot(wconv_ref[...], taps_ref[...],
                    preferred_element_type=jnp.float32)
    i_g = jax.nn.sigmoid(gates[0 * T:1 * T])        # gating math stays f32 (v5e)
    o_g = jax.nn.sigmoid(gates[1 * T:2 * T])
    g_g = jnp.tanh(gates[2 * T:3 * T])
    c_next = i_g * g_g                              # forget gate is dead: c_prev == 0
    h_bf = (o_g * jnp.tanh(c_next)).astype(jnp.bfloat16)   # (T, S*HW)

    # ---- reassemble hidden state into torch flatten order: row s = (t, y, x) --
    # 16 static, vreg-aligned (1, 128) stores into a small VMEM scratch.
    hbuf_ref[...] = jnp.zeros_like(hbuf_ref)        # rows SEQ..SPAD-1 stay zero
    for s in range(SEQ):
        for t in range(T):
            hbuf_ref[s:s + 1, t * HW:(t + 1) * HW] = h_bf[t:t + 1, s * HW:(s + 1) * HW]

    # ---- fused FC heads: ONE (8, 1024) @ (1024, 128) dot + lane-dense bias ----
    out_ref[...] = (jnp.dot(hbuf_ref[...], wh_ref[...],
                            preferred_element_type=jnp.float32) + bh_ref[...])


def dvnet4_forward(x, midas_in, params):
    S, _, Himg, Wimg = x.shape
    assert S == SEQ

    # TODO(synk): pretrained MiDaS-small + EfficientNet-B0 backbones not translated
    # (external .pt checkpoints); deterministic stand-in keeps all downstream shapes.
    midas_out = jnp.mean(midas_in, axis=1, keepdims=True)
    midas_out = jax.image.resize(midas_out, (S, 1, Himg, Wimg), method="bilinear")
    midas_out = jnp.broadcast_to(midas_out, (S, 3, Himg, Wimg))          # .expand(-1,3,-1,-1)
    pooled = midas_out.reshape(S, 3, FH, Himg // FH, FW, Wimg // FW).mean(axis=(3, 5))
    deep_feat = jnp.einsum("tc,schw->sthw", params["feat_proj"], pooled)  # (S,T,FH,FW)

    # ConvLSTM input taps: only the x half (h_prev == 0 channels pruned).  The
    # 3x3 SAME conv becomes K = (tap k, c_in) rows; batch folded onto lanes.
    # A ones row (bias) is appended and K zero-padded 73 -> 80 for clean tiles.
    xpad = jnp.pad(deep_feat, ((0, 0), (0, 0), (1, 1), (1, 1)))
    taps = jnp.stack(
        [xpad[:, :, dy:dy + FH, dx:dx + FW].reshape(S, T, HW)
         for dy in range(3) for dx in range(3)], axis=0)                  # (9,S,T,HW)
    taps = taps.transpose(0, 2, 1, 3).reshape(KTAP, S * HW)
    taps = jnp.concatenate(
        [taps, jnp.ones((1, S * HW), taps.dtype),
         jnp.zeros((KPAD - KTAP - 1, S * HW), taps.dtype)], axis=0)
    taps = taps.astype(jnp.bfloat16)                                      # (80, 256)

    # ConvLSTM conv weight (4T, 2T, 3, 3): keep gates i/o/g (forget gate dead
    # since c_prev == 0) and the x-input channel half; fuse to (3T, 9T), fold
    # the bias as an extra K column, pad to a (32, 80) bf16 tile-aligned block.
    w4 = params["lstm_w"].reshape(4, T, CIN, 3, 3)
    w3 = jnp.stack([w4[0], w4[2], w4[3]], axis=0)[:, :, :T]               # (3,T,T,3,3)
    wconv = (w3.transpose(0, 1, 3, 4, 2)                                  # (3,T,ky,kx,Tin)
             .reshape(3 * T, KTAP))
    b4 = params["lstm_b"].reshape(4, T)
    bconv = jnp.stack([b4[0], b4[2], b4[3]], axis=0).reshape(3 * T, 1)
    wconv = jnp.concatenate(
        [wconv, bconv, jnp.zeros((3 * T, KPAD - KTAP - 1), wconv.dtype)], axis=1)
    wconv = jnp.pad(wconv, ((0, GPAD - 3 * T), (0, 0))).astype(jnp.bfloat16)  # (32, 80)

    # Fused, lane-padded FC heads as ONE (ALL, NHP) slab; torch flatten order
    # (t, y, x) along K.  Bias kept as a (1, NHP) f32 lane-dense row.
    wh = jnp.concatenate([params["wasd_w"], params["x_w"], params["y_w"]], axis=0)
    wh = jnp.pad(wh, ((0, NHP - NH), (0, 0))).T.astype(jnp.bfloat16)      # (1024, 128)
    bh = jnp.concatenate([params["wasd_b"], params["x_b"], params["y_b"]])
    bh = jnp.pad(bh, (0, NHP - NH))[None, :].astype(jnp.float32)          # (1, 128)

    out = pl.pallas_call(
        _dvnet4_kernel,
        out_shape=jax.ShapeDtypeStruct((SPAD, NHP), jnp.float32),
        in_specs=[pl.BlockSpec(memory_space=pltpu.MemorySpace.VMEM)] * 4,
        out_specs=pl.BlockSpec(memory_space=pltpu.MemorySpace.VMEM),
        scratch_shapes=[pltpu.VMEM((SPAD, ALL), jnp.bfloat16)],
    )(taps, wconv, wh, bh)

    logit_wasd = out[:S, None, :N_WASD]
    logit_x = out[:S, None, N_WASD:N_WASD + N_X]
    logit_y = out[:S, None, N_WASD + N_X:N_WASD + N_X + N_Y]
    return logit_wasd, logit_x, logit_y


def reference(x, midas_in, params):
    """Pure-JAX mirror of the same forward (for correctness check)."""
    S, _, Himg, Wimg = x.shape
    midas_out = jnp.mean(midas_in, axis=1, keepdims=True)
    midas_out = jax.image.resize(midas_out, (S, 1, Himg, Wimg), method="bilinear")
    midas_out = jnp.broadcast_to(midas_out, (S, 3, Himg, Wimg))
    pooled = midas_out.reshape(S, 3, FH, Himg // FH, FW, Wimg // FW).mean(axis=(3, 5))
    deep_feat = jnp.einsum("tc,schw->sthw", params["feat_proj"], pooled)
    xcat = jnp.concatenate([deep_feat, jnp.zeros_like(deep_feat)], axis=1)
    gates = jax.lax.conv_general_dilated(
        xcat, params["lstm_w"], (1, 1), "SAME",
        dimension_numbers=("NCHW", "OIHW", "NCHW")) + params["lstm_b"][None, :, None, None]
    i_g, f_g, o_g, g_g = jnp.split(gates, 4, axis=1)
    c = jax.nn.sigmoid(i_g) * jnp.tanh(g_g)          # c_prev = 0
    h = jax.nn.sigmoid(o_g) * jnp.tanh(c)
    flat = h.reshape(S, -1)
    fc = lambda w, b: (flat @ w.T + b)[:, None, :]
    return (fc(params["wasd_w"], params["wasd_b"]),
            fc(params["x_w"], params["x_b"]),
            fc(params["y_w"], params["y_b"]))


if __name__ == "__main__":
    key = jax.random.PRNGKey(0)
    ks = jax.random.split(key, 12)

    def init(k, shape, fan_in):
        bound = 1.0 / jnp.sqrt(fan_in)
        return jax.random.uniform(k, shape, jnp.float32, -bound, bound)

    params = {
        "feat_proj": init(ks[0], (T, 3), 3.0),                 # backbone stand-in
        "lstm_w": init(ks[1], (4 * T, CIN, 3, 3), CIN * 9.0),  # ConvLSTM conv weight
        "lstm_b": init(ks[2], (4 * T,), CIN * 9.0),
        "wasd_w": init(ks[3], (N_WASD, ALL), float(ALL)),
        "wasd_b": init(ks[4], (N_WASD,), float(ALL)),
        "x_w": init(ks[5], (N_X, ALL), float(ALL)),
        "x_b": init(ks[6], (N_X,), float(ALL)),
        "y_w": init(ks[7], (N_Y, ALL), float(ALL)),
        "y_b": init(ks[8], (N_Y,), float(ALL)),
    }

    x = jax.random.normal(ks[9], (SEQ, 3, 32, 64), jnp.float32)          # NCHW frames
    midas_in = jax.random.normal(ks[10], (SEQ, 3, 32, 32), jnp.float32)  # NCHW midas input

    out = jax.block_until_ready(dvnet4_forward(x, midas_in, params))
    ref = reference(x, midas_in, params)
    for a, b in zip(out, ref):
        assert a.shape == b.shape, (a.shape, b.shape)
        assert jnp.allclose(a, b, atol=5e-2, rtol=5e-2), float(jnp.max(jnp.abs(a - b)))
    print("KERNEL_OK")
</pallas_src>

<mosaic_0001>
module attributes {stable_mosaic.version = 11 : i64} {
  func.func @_dvnet4_kernel(%arg0: memref<80x256xbf16, #tpu.memory_space<vmem>>, %arg1: memref<32x80xbf16, #tpu.memory_space<vmem>>, %arg2: memref<1024x128xbf16, #tpu.memory_space<vmem>>, %arg3: memref<1x128xf32, #tpu.memory_space<vmem>>, %arg4: memref<8x128xf32, #tpu.memory_space<vmem>>, %arg5: memref<8x1024xbf16, #tpu.memory_space<vmem>>) attributes {dimension_semantics = [], scalar_prefetch = 0 : i64, scratch_operands = 1 : i64, tpu.core_type = #tpu.core_type<tc>} {
    %c0 = arith.constant 0 : index
    %c0_0 = arith.constant 0 : index
    %0 = vector.load %arg1[%c0, %c0_0] : memref<32x80xbf16, #tpu.memory_space<vmem>>, vector<32x80xbf16>
    %c0_1 = arith.constant 0 : index
    %c0_2 = arith.constant 0 : index
    %1 = vector.load %arg0[%c0_1, %c0_2] : memref<80x256xbf16, #tpu.memory_space<vmem>>, vector<80x256xbf16>
    %cst = arith.constant dense<0.000000e+00> : vector<32x256xf32>
    %2 = tpu.matmul %0, %1, %cst {dimension_numbers = #tpu.dot_dimension_numbers<[1], [0], [0], [1], [0, 0, 1, 1], [], []>} : vector<32x80xbf16>, vector<80x256xbf16>, vector<32x256xf32> -> vector<32x256xf32>
    %3 = vector.extract_strided_slice %2 {offsets = [0, 0], sizes = [8, 256], strides = [1, 1]} : vector<32x256xf32> to vector<8x256xf32>
    %4 = arith.negf %3 : vector<8x256xf32>
    %5 = math.exp %4 : vector<8x256xf32>
    %cst_3 = arith.constant 1.000000e+00 : f32
    %6 = vector.broadcast %cst_3 : f32 to vector<8x256xf32>
    %7 = arith.addf %6, %5 : vector<8x256xf32>
    %8 = arith.divf %6, %7 : vector<8x256xf32>
    %9 = vector.extract_strided_slice %2 {offsets = [8, 0], sizes = [8, 256], strides = [1, 1]} : vector<32x256xf32> to vector<8x256xf32>
    %10 = arith.negf %9 : vector<8x256xf32>
    %11 = math.exp %10 : vector<8x256xf32>
    %cst_4 = arith.constant 1.000000e+00 : f32
    %12 = vector.broadcast %cst_4 : f32 to vector<8x256xf32>
    %13 = arith.addf %12, %11 : vector<8x256xf32>
    %14 = arith.divf %12, %13 : vector<8x256xf32>
    %15 = vector.extract_strided_slice %2 {offsets = [16, 0], sizes = [8, 256], strides = [1, 1]} : vector<32x256xf32> to vector<8x256xf32>
    %16 = math.tanh %15 : vector<8x256xf32>
    %17 = arith.mulf %8, %16 : vector<8x256xf32>
    %18 = math.tanh %17 : vector<8x256xf32>
    %19 = arith.mulf %14, %18 : vector<8x256xf32>
    %20 = arith.truncf %19 : vector<8x256xf32> to vector<8x256xbf16>
    %cst_5 = arith.constant 0.000000e+00 : bf16
    %21 = vector.broadcast %cst_5 : bf16 to vector<8x1024xbf16>
    %c0_6 = arith.constant 0 : index
    %c0_7 = arith.constant 0 : index
    %22 = vector.load %arg5[%c0_6, %c0_7] : memref<8x1024xbf16, #tpu.memory_space<vmem>>, vector<8x1024xbf16>
    tpu.vector_store %arg5[%c0_6, %c0_7], %21 {strides = array<i32>} : memref<8x1024xbf16, #tpu.memory_space<vmem>>, vector<8x1024xbf16>,
    %23 = vector.extract_strided_slice %20 {offsets = [0, 0], sizes = [1, 128], strides = [1, 1]} : vector<8x256xbf16> to vector<1x128xbf16>
    %c0_8 = arith.constant 0 : index
    %c0_9 = arith.constant 0 : index
    %24 = vector.load %arg5[%c0_8, %c0_9] : memref<8x1024xbf16, #tpu.memory_space<vmem>>, vector<1x128xbf16>
    tpu.vector_store %arg5[%c0_8, %c0_9], %23 {strides = array<i32>} : memref<8x1024xbf16, #tpu.memory_space<vmem>>, vector<1x128xbf16>,
    %25 = vector.extract_strided_slice %20 {offsets = [1, 0], sizes = [1, 128], strides = [1, 1]} : vector<8x256xbf16> to vector<1x128xbf16>
    %c0_10 = arith.constant 0 : index
    %c128 = arith.constant 128 : index
    %26 = vector.load %arg5[%c0_10, %c128] : memref<8x1024xbf16, #tpu.memory_space<vmem>>, vector<1x128xbf16>
    tpu.vector_store %arg5[%c0_10, %c128], %25 {strides = array<i32>} : memref<8x1024xbf16, #tpu.memory_space<vmem>>, vector<1x128xbf16>,
    %27 = vector.extract_strided_slice %20 {offsets = [2, 0], sizes = [1, 128], strides = [1, 1]} : vector<8x256xbf16> to vector<1x128xbf16>
    %c0_11 = arith.constant 0 : index
    %c256 = arith.constant 256 : index
    %28 = vector.load %arg5[%c0_11, %c256] : memref<8x1024xbf16, #tpu.memory_space<vmem>>, vector<1x128xbf16>
    tpu.vector_store %arg5[%c0_11, %c256], %27 {strides = array<i32>} : memref<8x1024xbf16, #tpu.memory_space<vmem>>, vector<1x128xbf16>,
    %29 = vector.extract_strided_slice %20 {offsets = [3, 0], sizes = [1, 128], strides = [1, 1]} : vector<8x256xbf16> to vector<1x128xbf16>
    %c0_12 = arith.constant 0 : index
    %c384 = arith.constant 384 : index
    %30 = vector.load %arg5[%c0_12, %c384] : memref<8x1024xbf16, #tpu.memory_space<vmem>>, vector<1x128xbf16>
    tpu.vector_store %arg5[%c0_12, %c384], %29 {strides = array<i32>} : memref<8x1024xbf16, #tpu.memory_space<vmem>>, vector<1x128xbf16>,
    %31 = vector.extract_strided_slice %20 {offsets = [4, 0], sizes = [1, 128], strides = [1, 1]} : vector<8x256xbf16> to vector<1x128xbf16>
    %c0_13 = arith.constant 0 : index
    %c512 = arith.constant 512 : index
    %32 = vector.load %arg5[%c0_13, %c512] : memref<8x1024xbf16, #tpu.memory_space<vmem>>, vector<1x128xbf16>
    tpu.vector_store %arg5[%c0_13, %c512], %31 {strides = array<i32>} : memref<8x1024xbf16, #tpu.memory_space<vmem>>, vector<1x128xbf16>,
    %33 = vector.extract_strided_slice %20 {offsets = [5, 0], sizes = [1, 128], strides = [1, 1]} : vector<8x256xbf16> to vector<1x128xbf16>
    %c0_14 = arith.constant 0 : index
    %c640 = arith.constant 640 : index
    %34 = vector.load %arg5[%c0_14, %c640] : memref<8x1024xbf16, #tpu.memory_space<vmem>>, vector<1x128xbf16>
    tpu.vector_store %arg5[%c0_14, %c640], %33 {strides = array<i32>} : memref<8x1024xbf16, #tpu.memory_space<vmem>>, vector<1x128xbf16>,
    %35 = vector.extract_strided_slice %20 {offsets = [6, 0], sizes = [1, 128], strides = [1, 1]} : vector<8x256xbf16> to vector<1x128xbf16>
    %c0_15 = arith.constant 0 : index
    %c768 = arith.constant 768 : index
    %36 = vector.load %arg5[%c0_15, %c768] : memref<8x1024xbf16, #tpu.memory_space<vmem>>, vector<1x128xbf16>
    tpu.vector_store %arg5[%c0_15, %c768], %35 {strides = array<i32>} : memref<8x1024xbf16, #tpu.memory_space<vmem>>, vector<1x128xbf16>,
    %37 = vector.extract_strided_slice %20 {offsets = [7, 0], sizes = [1, 128], strides = [1, 1]} : vector<8x256xbf16> to vector<1x128xbf16>
    %c0_16 = arith.constant 0 : index
    %c896 = arith.constant 896 : index
    %38 = vector.load %arg5[%c0_16, %c896] : memref<8x1024xbf16, #tpu.memory_space<vmem>>, vector<1x128xbf16>
    tpu.vector_store %arg5[%c0_16, %c896], %37 {strides = array<i32>} : memref<8x1024xbf16, #tpu.memory_space<vmem>>, vector<1x128xbf16>,
    %39 = vector.extract_strided_slice %20 {offsets = [0, 128], sizes = [1, 128], strides = [1, 1]} : vector<8x256xbf16> to vector<1x128xbf16>
    %c1 = arith.constant 1 : index
    %c0_17 = arith.constant 0 : index
    %40 = vector.load %arg5[%c1, %c0_17] : memref<8x1024xbf16, #tpu.memory_space<vmem>>, vector<1x128xbf16>
    tpu.vector_store %arg5[%c1, %c0_17], %39 {strides = array<i32>} : memref<8x1024xbf16, #tpu.memory_space<vmem>>, vector<1x128xbf16>,
    %41 = vector.extract_strided_slice %20 {offsets = [1, 128], sizes = [1, 128], strides = [1, 1]} : vector<8x256xbf16> to vector<1x128xbf16>
    %c1_18 = arith.constant 1 : index
    %c128_19 = arith.constant 128 : index
    %42 = vector.load %arg5[%c1_18, %c128_19] : memref<8x1024xbf16, #tpu.memory_space<vmem>>, vector<1x128xbf16>
    tpu.vector_store %arg5[%c1_18, %c128_19], %41 {strides = array<i32>} : memref<8x1024xbf16, #tpu.memory_space<vmem>>, vector<1x128xbf16>,
    %43 = vector.extract_strided_slice %20 {offsets = [2, 128], sizes = [1, 128], strides = [1, 1]} : vector<8x256xbf16> to vector<1x128xbf16>
    %c1_20 = arith.constant 1 : index
    %c256_21 = arith.constant 256 : index
    %44 = vector.load %arg5[%c1_20, %c256_21] : memref<8x1024xbf16, #tpu.memory_space<vmem>>, vector<1x128xbf16>
    tpu.vector_store %arg5[%c1_20, %c256_21], %43 {strides = array<i32>} : memref<8x1024xbf16, #tpu.memory_space<vmem>>, vector<1x128xbf16>,
    %45 = vector.extract_strided_slice %20 {offsets = [3, 128], sizes = [1, 128], strides = [1, 1]} : vector<8x256xbf16> to vector<1x128xbf16>
    %c1_22 = arith.constant 1 : index
    %c384_23 = arith.constant 384 : index
    %46 = vector.load %arg5[%c1_22, %c384_23] : memref<8x1024xbf16, #tpu.memory_space<vmem>>, vector<1x128xbf16>
    tpu.vector_store %arg5[%c1_22, %c384_23], %45 {strides = array<i32>} : memref<8x1024xbf16, #tpu.memory_space<vmem>>, vector<1x128xbf16>,
    %47 = vector.extract_strided_slice %20 {offsets = [4, 128], sizes = [1, 128], strides = [1, 1]} : vector<8x256xbf16> to vector<1x128xbf16>
    %c1_24 = arith.constant 1 : index
    %c512_25 = arith.constant 512 : index
    %48 = vector.load %arg5[%c1_24, %c512_25] : memref<8x1024xbf16, #tpu.memory_space<vmem>>, vector<1x128xbf16>
    tpu.vector_store %arg5[%c1_24, %c512_25], %47 {strides = array<i32>} : memref<8x1024xbf16, #tpu.memory_space<vmem>>, vector<1x128xbf16>,
    %49 = vector.extract_strided_slice %20 {offsets = [5, 128], sizes = [1, 128], strides = [1, 1]} : vector<8x256xbf16> to vector<1x128xbf16>
    %c1_26 = arith.constant 1 : index
    %c640_27 = arith.constant 640 : index
    %50 = vector.load %arg5[%c1_26, %c640_27] : memref<8x1024xbf16, #tpu.memory_space<vmem>>, vector<1x128xbf16>
    tpu.vector_store %arg5[%c1_26, %c640_27], %49 {strides = array<i32>} : memref<8x1024xbf16, #tpu.memory_space<vmem>>, vector<1x128xbf16>,
    %51 = vector.extract_strided_slice %20 {offsets = [6, 128], sizes = [1, 128], strides = [1, 1]} : vector<8x256xbf16> to vector<1x128xbf16>
    %c1_28 = arith.constant 1 : index
    %c768_29 = arith.constant 768 : index
    %52 = vector.load %arg5[%c1_28, %c768_29] : memref<8x1024xbf16, #tpu.memory_space<vmem>>, vector<1x128xbf16>
    tpu.vector_store %arg5[%c1_28, %c768_29], %51 {strides = array<i32>} : memref<8x1024xbf16, #tpu.memory_space<vmem>>, vector<1x128xbf16>,
    %53 = vector.extract_strided_slice %20 {offsets = [7, 128], sizes = [1, 128], strides = [1, 1]} : vector<8x256xbf16> to vector<1x128xbf16>
    %c1_30 = arith.constant 1 : index
    %c896_31 = arith.constant 896 : index
    %54 = vector.load %arg5[%c1_30, %c896_31] : memref<8x1024xbf16, #tpu.memory_space<vmem>>, vector<1x128xbf16>
    tpu.vector_store %arg5[%c1_30, %c896_31], %53 {strides = array<i32>} : memref<8x1024xbf16, #tpu.memory_space<vmem>>, vector<1x128xbf16>,
    %c0_32 = arith.constant 0 : index
    %c0_33 = arith.constant 0 : index
    %55 = vector.load %arg5[%c0_32, %c0_33] : memref<8x1024xbf16, #tpu.memory_space<vmem>>, vector<8x1024xbf16>
    %c0_34 = arith.constant 0 : index
    %c0_35 = arith.constant 0 : index
    %56 = vector.load %arg2[%c0_34, %c0_35] : memref<1024x128xbf16, #tpu.memory_space<vmem>>, vector<1024x128xbf16>
    %cst_36 = arith.constant dense<0.000000e+00> : vector<8x128xf32>
    %57 = tpu.matmul %55, %56, %cst_36 {dimension_numbers = #tpu.dot_dimension_numbers<[1], [0], [0], [1], [0, 0, 1, 1], [], []>} : vector<8x1024xbf16>, vector<1024x128xbf16>, vector<8x128xf32> -> vector<8x128xf32>
    %c0_37 = arith.constant 0 : index
    %c0_38 = arith.constant 0 : index
    %58 = vector.load %arg3[%c0_37, %c0_38] : memref<1x128xf32, #tpu.memory_space<vmem>>, vector<1x128xf32>
    %59 = vector.broadcast %58 : vector<1x128xf32> to vector<8x128xf32>
    %60 = arith.addf %57, %59 : vector<8x128xf32>
    %c0_39 = arith.constant 0 : index
    %c0_40 = arith.constant 0 : index
    %61 = vector.load %arg4[%c0_39, %c0_40] : memref<8x128xf32, #tpu.memory_space<vmem>>, vector<8x128xf32>
    tpu.vector_store %arg4[%c0_39, %c0_40], %60 {strides = array<i32>} : memref<8x128xf32, #tpu.memory_space<vmem>>, vector<8x128xf32>,
    return
  }
}

</mosaic_0001>

<llo_original>
// kernel: tpu_custom_call.1
$region0: #{tpu_custom_call.1}
  #allocation0 [shape = 'u32[]', space=smem, size = 0x4, offset = 0x4, fixed_abs, tag = 'smem constant byte address 0x4 - core index']
  #allocation1 [shape = 'u32[72,128]{1,0:T(1,128)}', space=vmem, size = 0x9000, scoped, tag = 'internal scratch']
  #allocation2 [shape = 'bf16[8,1024]{1,0:T(8,128)(2,1)}', space=vmem, size = 0x4000, scoped, tag = 'scratch operand']
  %s0 = inlined_call_operand.hbm [shape: bf16[80,256], index: 0, kind: input, shape index: {}]
  %s1 = inlined_call_operand.hbm [shape: bf16[32,80], index: 1, kind: input, shape index: {}]
  %s2 = inlined_call_operand.hbm [shape: bf16[1024,128], index: 2, kind: input, shape index: {}]
  %s3 = inlined_call_operand.vmem [shape: f32[1,128], index: 3, kind: input, shape index: {}]
  %s4 = inlined_call_operand.hbm [shape: f32[8,128], index: 4, kind: output, shape index: {}]
  %s5 = sld [smem:[#allocation0]]
  $region38: #{tpu_custom_call.1} parent=0
    _
  %s7 = ssub.s32 1, %s5
  %s8 = scalar_select 0, %s7, %s5
  $region1: #{tpu_custom_call.1} parent=0
    #allocation3 [shape = 'u8[40960]{0}', space=vmem, size = 0xa000, scoped, tag = 'input window, operand 0, single buffered']
    #allocation4 [shape = 's32[1]{0}', space=sflag, size = 0x4, scoped, tag = 'scoped memory for tpu_custom_call.1']
    #allocation5 [shape = 's32[1]{0}', space=sflag, size = 0x4, scoped, tag = 'scoped memory for tpu_custom_call.1']
    #allocation6 [shape = 'u8[8192]{0}', space=vmem, size = 0x2000, scoped, tag = 'input window, operand 1, single buffered']
    #allocation7 [shape = 's32[1]{0}', space=sflag, size = 0x4, scoped, tag = 'scoped memory for tpu_custom_call.1']
    #allocation8 [shape = 'u8[262144]{0}', space=vmem, size = 0x40000, scoped, tag = 'input window, operand 2, single buffered']
    #allocation9 [shape = 'u8[4096]{0}', space=vmem, size = 0x1000, scoped, tag = 'output window, operand 0, single buffered']
    %9 = vsyncpa [#allocation4], 0
    %10 = vsyncpa [#allocation7], 0
    %11 = vsyncpa [#allocation5], 0
    // Predicated region
    $region2: #{tpu_custom_call.1} parent=1 // pred_check
      _
    $region3: #{tpu_custom_call.1} parent=1 // pred_check_branch
      %13 = sbr.rel (0) target = $region5
    $region4: #{tpu_custom_call.1} parent=1 // pred_region
      %15 = vsyncadd [#allocation4], 0
      %s16 = sshll.u32 %s0, 4
      %s17 = int_to_ptr.hbm [resolvable:$true] %s16
      %s18 = sshll.u32 [#allocation3], 4
      %s19 = int_to_ptr.vmem [resolvable:$true] %s18
      %24 = dma.hbm_to_vmem [thread:$0]  %s17, 1280, %s19, [#allocation4], 128, 128, 8
    $region5: #{tpu_custom_call.1} parent=1 // pred_fallthru
      _
    // Predicated region
    $region6: #{tpu_custom_call.1} parent=1 // pred_check
      _
    $region7: #{tpu_custom_call.1} parent=1 // pred_check_branch
      %26 = sbr.rel (0) target = $region9
    $region8: #{tpu_custom_call.1} parent=1 // pred_region
      %28 = vsyncadd [#allocation7], 0
      %s29 = sshll.u32 %s1, 4
      %s30 = int_to_ptr.hbm [resolvable:$true] %s29
      %s31 = sshll.u32 [#allocation6], 4
      %s32 = int_to_ptr.vmem [resolvable:$true] %s31
      %37 = dma.hbm_to_vmem [thread:$0]  %s30, 256, %s32, [#allocation7], 64, 64, 4
    $region9: #{tpu_custom_call.1} parent=1 // pred_fallthru
      _
    // Predicated region
    $region10: #{tpu_custom_call.1} parent=1 // pred_check
      _
    $region11: #{tpu_custom_call.1} parent=1 // pred_check_branch
      %39 = sbr.rel (0) target = $region13
    $region12: #{tpu_custom_call.1} parent=1 // pred_region
      %41 = vsyncadd [#allocation7], 0
      %s42 = sshll.u32 %s2, 4
      %s43 = int_to_ptr.hbm [resolvable:$true] %s42
      %s44 = sshll.u32 [#allocation8], 4
      %s45 = int_to_ptr.vmem [resolvable:$true] %s44
      %50 = dma.hbm_to_vmem [thread:$0]  %s43, 8192, %s45, [#allocation7], 64, 64, 4
    $region13: #{tpu_custom_call.1} parent=1 // pred_fallthru
      _
    // Predicated region
    $region14: #{tpu_custom_call.1} parent=1 // pred_check
      _
    $region15: #{tpu_custom_call.1} parent=1 // pred_check_branch
      %52 = sbr.rel (0) target = $region17
    $region16: #{tpu_custom_call.1} parent=1 // pred_region
      _
    $region17: #{tpu_custom_call.1} parent=1 // pred_fallthru
      _
    // Predicated region
    $region18: #{tpu_custom_call.1} parent=1 // pred_check
      _
    $region19: #{tpu_custom_call.1} parent=1 // pred_check_branch
      %54 = sbr.rel (0) target = $region21
    $region20: #{tpu_custom_call.1} parent=1 // pred_region
      %56 = dma.done [#allocation4], 1280
    $region21: #{tpu_custom_call.1} parent=1 // pred_fallthru
      _
    // Predicated region
    $region22: #{tpu_custom_call.1} parent=1 // pred_check
      _
    $region23: #{tpu_custom_call.1} parent=1 // pred_check_branch
      %58 = sbr.rel (0) target = $region25
    $region24: #{tpu_custom_call.1} parent=1 // pred_region
      %60 = dma.done [#allocation7], 256
    $region25: #{tpu_custom_call.1} parent=1 // pred_fallthru
      _
    // Predicated region
    $region26: #{tpu_custom_call.1} parent=1 // pred_check
      _
    $region27: #{tpu_custom_call.1} parent=1 // pred_check_branch
      %62 = sbr.rel (0) target = $region29
    $region28: #{tpu_custom_call.1} parent=1 // pred_region
      %64 = dma.done [#allocation7], 8192
    $region29: #{tpu_custom_call.1} parent=1 // pred_fallthru
      _
    %v66 = vld [vmem:[#allocation6] sm:$0xf]
    %v67 = vld [vmem:[#allocation6 + $0x4] sm:$0xf]
    %v68 = vld [vmem:[#allocation6 + $0x8] sm:$0xf]
    %v69 = vld [vmem:[#allocation6 + $0xc] sm:$0xf]
    %v70 = vld [vmem:[#allocation3] sm:$0xff]
    %v71 = vld [vmem:[#allocation3 + $0x8] sm:$0xff]
    %v72 = vld [vmem:[#allocation3 + $0x10] sm:$0xff]
    %v73 = vld [vmem:[#allocation3 + $0x18] sm:$0xff]
    %v74 = vld [vmem:[#allocation3 + $0x20] sm:$0xff]
    %v75 = vld [vmem:[#allocation3 + $0x28] sm:$0xff]
    %v76 = vld [vmem:[#allocation3 + $0x30] sm:$0xff]
    %v77 = vld [vmem:[#allocation3 + $0x38] sm:$0xff]
    %v78 = vld [vmem:[#allocation3 + $0x40] sm:$0xff]
    %v79 = vld [vmem:[#allocation3 + $0x48] sm:$0xff]
    %v84 = vunpack.c.l.b16 %v66
    %v85 = vunpack.c.l.b16 %v67
    %v86 = vunpack.c.l.b16 %v68
    %v87 = vunpack.c.l.b16 %v69
    %v88 = vpack.c.b16 %v85, %v84
    %v89 = vpack.c.b16 %v87, %v86
    %v100 = vunpack.c.l.b16 %v70
    %v101 = vunpack.c.h.b16 %v70
    %v102 = vunpack.c.l.b16 %v71
    %v103 = vunpack.c.h.b16 %v71
    %v104 = vunpack.c.l.b16 %v72
    %v105 = vunpack.c.h.b16 %v72
    %v106 = vunpack.c.l.b16 %v73
    %v107 = vunpack.c.h.b16 %v73
    %v108 = vunpack.c.l.b16 %v74
    %v109 = vunpack.c.h.b16 %v74
    %v110 = vunpack.c.l.b16 %v75
    %v111 = vunpack.c.h.b16 %v75
    %v112 = vunpack.c.l.b16 %v76
    %v113 = vunpack.c.h.b16 %v76
    %v114 = vunpack.c.l.b16 %v77
    %v115 = vunpack.c.h.b16 %v77
    %v116 = vunpack.c.l.b16 %v78
    %v117 = vunpack.c.h.b16 %v78
    %v118 = vunpack.c.l.b16 %v79
    %v119 = vunpack.c.h.b16 %v79
    %v120 = vpack.c.b16 %v102, %v100
    %v121 = vpack.c.b16 %v103, %v101
    %v122 = vpack.c.b16 %v106, %v104
    %v123 = vpack.c.b16 %v107, %v105
    %v124 = vpack.c.b16 %v110, %v108
    %v125 = vpack.c.b16 %v111, %v109
    %v126 = vpack.c.b16 %v114, %v112
    %v127 = vpack.c.b16 %v115, %v113
    %v128 = vpack.c.b16 %v118, %v116
    %v129 = vpack.c.b16 %v119, %v117
    %vm140 = vcmask 654336
    %v142 = vsel %vm140, %v88, 0
    %v145 = vsel %vm140, %v89, 0
    %147 = vmatpush.bf16.msra.mxu0 0
    %148 = vmatpush.bf16.msra.mxu0 0
    %149 = vmatpush.bf16.msra.mxu0 0
    %150 = vmatpush.bf16.msra.mxu0 %v128
    %151 = vmatpush.bf16.msra.mxu0 %v126
    %152 = vmatpush.bf16.msra.mxu0 %v124
    %153 = vmatpush.bf16.msra.mxu0 %v122
    %154 = vmatpush.bf16.msra.mxu0 %v120
    %155 = vmatmul.bf16.gmra.mxu0 %v142
    %v156 = vpop.f32.mrf.mxu0
    %v157 = vadd.f32 0.0, %v156
    %v158 = vpop.f32.mrf.mxu0
    %v159 = vadd.f32 0.0, %v158
    %160 = vmatmul.bf16.gmra.mxu0 %v145
    %v161 = vpop.f32.mrf.mxu0
    %v162 = vadd.f32 0.0, %v161
    %v163 = vpop.f32.mrf.mxu0
    %164 = vdwg.mxu0
    %165 = vmatpush.bf16.msra.mxu0 0
    %166 = vmatpush.bf16.msra.mxu0 0
    %167 = vmatpush.bf16.msra.mxu0 0
    %168 = vmatpush.bf16.msra.mxu0 %v129
    %169 = vmatpush.bf16.msra.mxu0 %v127
    %170 = vmatpush.bf16.msra.mxu0 %v125
    %171 = vmatpush.bf16.msra.mxu0 %v123
    %172 = vmatpush.bf16.msra.mxu0 %v121
    %173 = vmatmul.bf16.gmra.mxu0 %v142
    %v174 = vpop.f32.mrf.mxu0
    %v175 = vadd.f32 0.0, %v174
    %v176 = vpop.f32.mrf.mxu0
    %v177 = vadd.f32 0.0, %v176
    %178 = vmatmul.bf16.gmra.mxu0 %v145
    %v179 = vpop.f32.mrf.mxu0
    %v180 = vadd.f32 0.0, %v179
    %v181 = vpop.f32.mrf.mxu0
    %182 = vdwg.mxu0
    %v183 = vxor.u32 %v157, 2147483648
    %v184 = vxor.u32 %v175, 2147483648
    %v185 = vmul.f32 %v183, 1.442695
    %v186 = vpow.pop %v185
    %v187 = vmul.f32 %v184, 1.442695
    %v188 = vpow.pop %v187
    %v189 = vadd.f32 %v186, 1.0
    %v190 = vadd.f32 %v188, 1.0
    %v191 = vrcp.pop %v189
    %v192 = vmul.f32 %v189, %v191
    %v193 = vsub.f32 1.0, %v192
    %v194 = vmul.f32 %v191, %v193
    %v195 = vadd.f32 %v191, %v194
    %vm196 = vweird.f32 %v189
    %vm197 = vweird.f32 %v191
    %vm198 = vmor %vm196, %vm197
    %v199 = vsel %vm198, %v191, %v195
    %v200 = vand.u32 2147483647, %v189
    %vm201 = vcmp.eq.f32.partialorder %v200, 8.507059e+37
    %v202 = vand.u32 %v189, 2147483648
    %v203 = vor.u32 1.1754944e-38, %v202
    %v204 = vsel %vm201, %v203, %v199
    %v205 = vmul.f32 1.0, %v204
    %v206 = vrcp.pop %v190
    %v207 = vmul.f32 %v190, %v206
    %v208 = vsub.f32 1.0, %v207
    %v209 = vmul.f32 %v206, %v208
    %v210 = vadd.f32 %v206, %v209
    %vm211 = vweird.f32 %v190
    %vm212 = vweird.f32 %v206
    %vm213 = vmor %vm211, %vm212
    %v214 = vsel %vm213, %v206, %v210
    %v215 = vand.u32 2147483647, %v190
    %vm216 = vcmp.eq.f32.partialorder %v215, 8.507059e+37
    %v217 = vand.u32 %v190, 2147483648
    %v218 = vor.u32 1.1754944e-38, %v217
    %v219 = vsel %vm216, %v218, %v214
    %v220 = vmul.f32 1.0, %v219
    %v221 = vxor.u32 %v159, 2147483648
    %v222 = vxor.u32 %v177, 2147483648
    %v223 = vmul.f32 %v221, 1.442695
    %v224 = vpow.pop %v223
    %v225 = vmul.f32 %v222, 1.442695
    %v226 = vpow.pop %v225
    %v227 = vadd.f32 %v224, 1.0
    %v228 = vadd.f32 %v226, 1.0
    %v229 = vrcp.pop %v227
    %v230 = vmul.f32 %v227, %v229
    %v231 = vsub.f32 1.0, %v230
    %v232 = vmul.f32 %v229, %v231
    %v233 = vadd.f32 %v229, %v232
    %vm234 = vweird.f32 %v227
    %vm235 = vweird.f32 %v229
    %vm236 = vmor %vm234, %vm235
    %v237 = vsel %vm236, %v229, %v233
    %v238 = vand.u32 2147483647, %v227
    %vm239 = vcmp.eq.f32.partialorder %v238, 8.507059e+37
    %v240 = vand.u32 %v227, 2147483648
    %v241 = vor.u32 1.1754944e-38, %v240
    %v242 = vsel %vm239, %v241, %v237
    %v243 = vmul.f32 1.0, %v242
    %v244 = vrcp.pop %v228
    %v245 = vmul.f32 %v228, %v244
    %v246 = vsub.f32 1.0, %v245
    %v247 = vmul.f32 %v244, %v246
    %v248 = vadd.f32 %v244, %v247
    %vm249 = vweird.f32 %v228
    %vm250 = vweird.f32 %v244
    %vm251 = vmor %vm249, %vm250
    %v252 = vsel %vm251, %v244, %v248
    %v253 = vand.u32 2147483647, %v228
    %vm254 = vcmp.eq.f32.partialorder %v253, 8.507059e+37
    %v255 = vand.u32 %v228, 2147483648
    %v256 = vor.u32 1.1754944e-38, %v255
    %v257 = vsel %vm254, %v256, %v252
    %v258 = vmul.f32 1.0, %v257
    %v259 = vtanh.pop %v162
    %v260 = vtanh.pop %v180
    %v261 = vmul.f32 %v205, %v259
    %v262 = vmul.f32 %v220, %v260
    %v263 = vtanh.pop %v261
    %v264 = vtanh.pop %v262
    %v265 = vmul.f32 %v243, %v263
    %v266 = vmul.f32 %v258, %v264
    %v267 = vpack.c.bf16 %v266, %v265
    %268 = vst [vmem:[#allocation2] sm:$0xff] 0
    %269 = vst [vmem:[#allocation2 + $0x8] sm:$0xff] 0
    %270 = vst [vmem:[#allocation2 + $0x10] sm:$0xff] 0
    %271 = vst [vmem:[#allocation2 + $0x18] sm:$0xff] 0
    %vm272 = vcmask 1040384
    %vm273 = vsmask.f32 256
    %vm274 = vmand %vm272, %vm273
    %v275 = vld [vmem:[#allocation2] sm:$0x1]
    %v276 = vsel %vm274, %v267, %v275
    %277 = vst [vmem:[#allocation2] sm:$0x1] %v276
    %v279 = vshrl.u32 %v267, 16
    %v281 = vrot.slane %v279, 4
    %v282 = vrot.slane %v281, 4
    %v284 = vld [vmem:[#allocation2 + $0x4] sm:$0x1]
    %v285 = vsel %vm274, %v282, %v284
    %286 = vst [vmem:[#allocation2 + $0x4] sm:$0x1] %v285
    %v288 = vrot.slane %v267, 5
    %v289 = vrot.slane %v288, 4
    %v291 = vld [vmem:[#allocation2 + $0x8] sm:$0x1]
    %v292 = vsel %vm274, %v289, %v291
    %293 = vst [vmem:[#allocation2 + $0x8] sm:$0x1] %v292
    %v294 = vrot.slane %v279, 5
    %v295 = vrot.slane %v294, 4
    %v297 = vld [vmem:[#allocation2 + $0xc] sm:$0x1]
    %v298 = vsel %vm274, %v295, %v297
    %299 = vst [vmem:[#allocation2 + $0xc] sm:$0x1] %v298
    %v300 = vrot.slane %v267, 6
    %v301 = vrot.slane %v300, 4
    %v303 = vld [vmem:[#allocation2 + $0x10] sm:$0x1]
    %v304 = vsel %vm274, %v301, %v303
    %305 = vst [vmem:[#allocation2 + $0x10] sm:$0x1] %v304
    %v306 = vrot.slane %v279, 6
    %v307 = vrot.slane %v306, 4
    %v309 = vld [vmem:[#allocation2 + $0x14] sm:$0x1]
    %v310 = vsel %vm274, %v307, %v309
    %311 = vst [vmem:[#allocation2 + $0x14] sm:$0x1] %v310
    %v312 = vrot.slane %v267, 7
    %v313 = vrot.slane %v312, 4
    %v315 = vld [vmem:[#allocation2 + $0x18] sm:$0x1]
    %v316 = vsel %vm274, %v313, %v315
    %317 = vst [vmem:[#allocation2 + $0x18] sm:$0x1] %v316
    %v318 = vrot.slane %v279, 7
    %v319 = vrot.slane %v318, 4
    %v321 = vld [vmem:[#allocation2 + $0x1c] sm:$0x1]
    %v322 = vsel %vm274, %v319, %v321
    %323 = vst [vmem:[#allocation2 + $0x1c] sm:$0x1] %v322
    %v324 = vshll.u32 %v267, 16
    %v326 = vrot.slane %v324, 4
    %vm328 = vsmask.f32 7938
    %vm329 = vmand %vm272, %vm328
    %v330 = vld [vmem:[#allocation2] sm:$0x1]
    %v331 = vsel %vm329, %v326, %v330
    %332 = vst [vmem:[#allocation2] sm:$0x1] %v331
    %v333 = vrot.slane %v267, 4
    %v335 = vld [vmem:[#allocation2 + $0x4] sm:$0x1]
    %v336 = vsel %vm329, %v333, %v335
    %337 = vst [vmem:[#allocation2 + $0x4] sm:$0x1] %v336
    %v338 = vrot.slane %v324, 5
    %v339 = vrot.slane %v338, 4
    %v340 = vrot.slane %v339, 4
    %v342 = vld [vmem:[#allocation2 + $0x8] sm:$0x1]
    %v343 = vsel %vm329, %v340, %v342
    %344 = vst [vmem:[#allocation2 + $0x8] sm:$0x1] %v343
    %v345 = vrot.slane %v289, 4
    %v347 = vld [vmem:[#allocation2 + $0xc] sm:$0x1]
    %v348 = vsel %vm329, %v345, %v347
    %349 = vst [vmem:[#allocation2 + $0xc] sm:$0x1] %v348
    %v350 = vrot.slane %v324, 6
    %v351 = vrot.slane %v350, 4
    %v352 = vrot.slane %v351, 4
    %v354 = vld [vmem:[#allocation2 + $0x10] sm:$0x1]
    %v355 = vsel %vm329, %v352, %v354
    %356 = vst [vmem:[#allocation2 + $0x10] sm:$0x1] %v355
    %v357 = vrot.slane %v301, 4
    %v359 = vld [vmem:[#allocation2 + $0x14] sm:$0x1]
    %v360 = vsel %vm329, %v357, %v359
    %361 = vst [vmem:[#allocation2 + $0x14] sm:$0x1] %v360
    %v362 = vrot.slane %v324, 7
    %v363 = vrot.slane %v362, 4
    %v364 = vrot.slane %v363, 4
    %v366 = vld [vmem:[#allocation2 + $0x18] sm:$0x1]
    %v367 = vsel %vm329, %v364, %v366
    %368 = vst [vmem:[#allocation2 + $0x18] sm:$0x1] %v367
    %v369 = vrot.slane %v313, 4
    %v371 = vld [vmem:[#allocation2 + $0x1c] sm:$0x1]
    %v372 = vsel %vm329, %v369, %v371
    %373 = vst [vmem:[#allocation2 + $0x1c] sm:$0x1] %v372
    %v374 = vld [vmem:[#allocation2] sm:$0xff]
    %v375 = vld [vmem:[#allocation2 + $0x8] sm:$0xff]
    %v376 = vld [vmem:[#allocation2 + $0x10] sm:$0xff]
    %v377 = vld [vmem:[#allocation2 + $0x18] sm:$0xff]
    %v378 = vld [vmem:[#allocation8] sm:$0xf]
    %v379 = vld [vmem:[#allocation8 + $0x4] sm:$0xf]
    %v380 = vld [vmem:[#allocation8 + $0x8] sm:$0xf]
    %v381 = vld [vmem:[#allocation8 + $0xc] sm:$0xf]
    %v382 = vld [vmem:[#allocation8 + $0x10] sm:$0xf]
    %v383 = vld [vmem:[#allocation8 + $0x14] sm:$0xf]
    %v384 = vld [vmem:[#allocation8 + $0x18] sm:$0xf]
    %v385 = vld [vmem:[#allocation8 + $0x1c] sm:$0xf]
    %v386 = vld [vmem:[#allocation8 + $0x20] sm:$0xf]
    %v387 = vld [vmem:[#allocation8 + $0x24] sm:$0xf]
    %v388 = vld [vmem:[#allocation8 + $0x28] sm:$0xf]
    %v389 = vld [vmem:[#allocation8 + $0x2c] sm:$0xf]
    %v390 = vld [vmem:[#allocation8 + $0x30] sm:$0xf]
    %v391 = vld [vmem:[#allocation8 + $0x34] sm:$0xf]
    %v392 = vld [vmem:[#allocation8 + $0x38] sm:$0xf]
    %v393 = vld [vmem:[#allocation8 + $0x3c] sm:$0xf]
    %v394 = vld [vmem:[#allocation8 + $0x40] sm:$0xf]
    %v395 = vld [vmem:[#allocation8 + $0x44] sm:$0xf]
    %v396 = vld [vmem:[#allocation8 + $0x48] sm:$0xf]
    %v397 = vld [vmem:[#allocation8 + $0x4c] sm:$0xf]
    %v398 = vld [vmem:[#allocation8 + $0x50] sm:$0xf]
    %v399 = vld [vmem:[#allocation8 + $0x54] sm:$0xf]
    %v400 = vld [vmem:[#allocation8 + $0x58] sm:$0xf]
    %v401 = vld [vmem:[#allocation8 + $0x5c] sm:$0xf]
    %v402 = vld [vmem:[#allocation8 + $0x60] sm:$0xf]
    %v403 = vld [vmem:[#allocation8 + $0x64] sm:$0xf]
    %v404 = vld [vmem:[#allocation8 + $0x68] sm:$0xf]
    %v405 = vld [vmem:[#allocation8 + $0x6c] sm:$0xf]
    %v406 = vld [vmem:[#allocation8 + $0x70] sm:$0xf]
    %v407 = vld [vmem:[#allocation8 + $0x74] sm:$0xf]
    %v408 = vld [vmem:[#allocation8 + $0x78] sm:$0xf]
    %v409 = vld [vmem:[#allocation8 + $0x7c] sm:$0xf]
    %v410 = vld [vmem:[#allocation8 + $0x80] sm:$0xf]
    %v411 = vld [vmem:[#allocation8 + $0x84] sm:$0xf]
    %v412 = vld [vmem:[#allocation8 + $0x88] sm:$0xf]
    %v413 = vld [vmem:[#allocation8 + $0x8c] sm:$0xf]
    %v414 = vld [vmem:[#allocation8 + $0x90] sm:$0xf]
    %v415 = vld [vmem:[#allocation8 + $0x94] sm:$0xf]
    %v416 = vld [vmem:[#allocation8 + $0x98] sm:$0xf]
    %v417 = vld [vmem:[#allocation8 + $0x9c] sm:$0xf]
    %v418 = vld [vmem:[#allocation8 + $0xa0] sm:$0xf]
    %v419 = vld [vmem:[#allocation8 + $0xa4] sm:$0xf]
    %v420 = vld [vmem:[#allocation8 + $0xa8] sm:$0xf]
    %v421 = vld [vmem:[#allocation8 + $0xac] sm:$0xf]
    %v422 = vld [vmem:[#allocation8 + $0xb0] sm:$0xf]
    %v423 = vld [vmem:[#allocation8 + $0xb4] sm:$0xf]
    %v424 = vld [vmem:[#allocation8 + $0xb8] sm:$0xf]
    %v425 = vld [vmem:[#allocation8 + $0xbc] sm:$0xf]
    %v426 = vld [vmem:[#allocation8 + $0xc0] sm:$0xf]
    %v427 = vld [vmem:[#allocation8 + $0xc4] sm:$0xf]
    %v428 = vld [vmem:[#allocation8 + $0xc8] sm:$0xf]
    %v429 = vld [vmem:[#allocation8 + $0xcc] sm:$0xf]
    %v430 = vld [vmem:[#allocation8 + $0xd0] sm:$0xf]
    %v431 = vld [vmem:[#allocation8 + $0xd4] sm:$0xf]
    %v432 = vld [vmem:[#allocation8 + $0xd8] sm:$0xf]
    %v433 = vld [vmem:[#allocation8 + $0xdc] sm:$0xf]
    %v434 = vld [vmem:[#allocation8 + $0xe0] sm:$0xf]
    %v435 = vld [vmem:[#allocation8 + $0xe4] sm:$0xf]
    %v436 = vld [vmem:[#allocation8 + $0xe8] sm:$0xf]
    %v437 = vld [vmem:[#allocation8 + $0xec] sm:$0xf]
    %v438 = vld [vmem:[#allocation8 + $0xf0] sm:$0xf]
    %v439 = vld [vmem:[#allocation8 + $0xf4] sm:$0xf]
    %v440 = vld [vmem:[#allocation8 + $0xf8] sm:$0xf]
    %v441 = vld [vmem:[#allocation8 + $0xfc] sm:$0xf]
    %v442 = vld [vmem:[#allocation8 + $0x100] sm:$0xf]
    %v443 = vld [vmem:[#allocation8 + $0x104] sm:$0xf]
    %v444 = vld [vmem:[#allocation8 + $0x108] sm:$0xf]
    %v445 = vld [vmem:[#allocation8 + $0x10c] sm:$0xf]
    %v446 = vld [vmem:[#allocation8 + $0x110] sm:$0xf]
    %v447 = vld [vmem:[#allocation8 + $0x114] sm:$0xf]
    %v448 = vld [vmem:[#allocation8 + $0x118] sm:$0xf]
    %v449 = vld [vmem:[#allocation8 + $0x11c] sm:$0xf]
    %v450 = vld [vmem:[#allocation8 + $0x120] sm:$0xf]
    %v451 = vld [vmem:[#allocation8 + $0x124] sm:$0xf]
    %v452 = vld [vmem:[#allocation8 + $0x128] sm:$0xf]
    %v453 = vld [vmem:[#allocation8 + $0x12c] sm:$0xf]
    %v454 = vld [vmem:[#allocation8 + $0x130] sm:$0xf]
    %v455 = vld [vmem:[#allocation8 + $0x134] sm:$0xf]
    %v456 = vld [vmem:[#allocation8 + $0x138] sm:$0xf]
    %v457 = vld [vmem:[#allocation8 + $0x13c] sm:$0xf]
    %v458 = vld [vmem:[#allocation8 + $0x140] sm:$0xf]
    %v459 = vld [vmem:[#allocation8 + $0x144] sm:$0xf]
    %v460 = vld [vmem:[#allocation8 + $0x148] sm:$0xf]
    %v461 = vld [vmem:[#allocation8 + $0x14c] sm:$0xf]
    %v462 = vld [vmem:[#allocation8 + $0x150] sm:$0xf]
    %v463 = vld [vmem:[#allocation8 + $0x154] sm:$0xf]
    %v464 = vld [vmem:[#allocation8 + $0x158] sm:$0xf]
    %v465 = vld [vmem:[#allocation8 + $0x15c] sm:$0xf]
    %v466 = vld [vmem:[#allocation8 + $0x160] sm:$0xf]
    %v467 = vld [vmem:[#allocation8 + $0x164] sm:$0xf]
    %v468 = vld [vmem:[#allocation8 + $0x168] sm:$0xf]
    %v469 = vld [vmem:[#allocation8 + $0x16c] sm:$0xf]
    %v470 = vld [vmem:[#allocation8 + $0x170] sm:$0xf]
    %v471 = vld [vmem:[#allocation8 + $0x174] sm:$0xf]
    %v472 = vld [vmem:[#allocation8 + $0x178] sm:$0xf]
    %v473 = vld [vmem:[#allocation8 + $0x17c] sm:$0xf]
    %v474 = vld [vmem:[#allocation8 + $0x180] sm:$0xf]
    %v475 = vld [vmem:[#allocation8 + $0x184] sm:$0xf]
    %v476 = vld [vmem:[#allocation8 + $0x188] sm:$0xf]
    %v477 = vld [vmem:[#allocation8 + $0x18c] sm:$0xf]
    %v478 = vld [vmem:[#allocation8 + $0x190] sm:$0xf]
    %v479 = vld [vmem:[#allocation8 + $0x194] sm:$0xf]
    %v480 = vld [vmem:[#allocation8 + $0x198] sm:$0xf]
    %v481 = vld [vmem:[#allocation8 + $0x19c] sm:$0xf]
    %v482 = vld [vmem:[#allocation8 + $0x1a0] sm:$0xf]
    %v483 = vld [vmem:[#allocation8 + $0x1a4] sm:$0xf]
    %v484 = vld [vmem:[#allocation8 + $0x1a8] sm:$0xf]
    %v485 = vld [vmem:[#allocation8 + $0x1ac] sm:$0xf]
    %v486 = vld [vmem:[#allocation8 + $0x1b0] sm:$0xf]
    %v487 = vld [vmem:[#allocation8 + $0x1b4] sm:$0xf]
    %v488 = vld [vmem:[#allocation8 + $0x1b8] sm:$0xf]
    %v489 = vld [vmem:[#allocation8 + $0x1bc] sm:$0xf]
    %v490 = vld [vmem:[#allocation8 + $0x1c0] sm:$0xf]
    %v491 = vld [vmem:[#allocation8 + $0x1c4] sm:$0xf]
    %v492 = vld [vmem:[#allocation8 + $0x1c8] sm:$0xf]
    %v493 = vld [vmem:[#allocation8 + $0x1cc] sm:$0xf]
    %v494 = vld [vmem:[#allocation8 + $0x1d0] sm:$0xf]
    %v495 = vld [vmem:[#allocation8 + $0x1d4] sm:$0xf]
    %v496 = vld [vmem:[#allocation8 + $0x1d8] sm:$0xf]
    %v497 = vld [vmem:[#allocation8 + $0x1dc] sm:$0xf]
    %v498 = vld [vmem:[#allocation8 + $0x1e0] sm:$0xf]
    %v499 = vld [vmem:[#allocation8 + $0x1e4] sm:$0xf]
    %v500 = vld [vmem:[#allocation8 + $0x1e8] sm:$0xf]
    %v501 = vld [vmem:[#allocation8 + $0x1ec] sm:$0xf]
    %v502 = vld [vmem:[#allocation8 + $0x1f0] sm:$0xf]
    %v503 = vld [vmem:[#allocation8 + $0x1f4] sm:$0xf]
    %v504 = vld [vmem:[#allocation8 + $0x1f8] sm:$0xf]
    %v505 = vld [vmem:[#allocation8 + $0x1fc] sm:$0xf]
    %v506 = vld [vmem:[%s3] sm:$0x1]
    %v508 = vperm.slane %v506, 0
    %v514 = vunpack.c.l.b16 %v374
    %v515 = vunpack.c.h.b16 %v374
    %v516 = vunpack.c.l.b16 %v375
    %v517 = vunpack.c.h.b16 %v375
    %v518 = vunpack.c.l.b16 %v376
    %v519 = vunpack.c.h.b16 %v376
    %v520 = vunpack.c.l.b16 %v377
    %v521 = vunpack.c.h.b16 %v377
    %v522 = vpack.c.b16 %v514, %v514
    %v523 = vpack.c.b16 %v515, %v515
    %v524 = vpack.c.b16 %v516, %v516
    %v525 = vpack.c.b16 %v517, %v517
    %v526 = vpack.c.b16 %v518, %v518
    %v527 = vpack.c.b16 %v519, %v519
    %v528 = vpack.c.b16 %v520, %v520
    %v529 = vpack.c.b16 %v521, %v521
    %v666 = vunpack.c.l.b16 %v378
    %v667 = vunpack.c.l.b16 %v379
    %v668 = vunpack.c.l.b16 %v380
    %v669 = vunpack.c.l.b16 %v381
    %v670 = vunpack.c.l.b16 %v382
    %v671 = vunpack.c.l.b16 %v383
    %v672 = vunpack.c.l.b16 %v384
    %v673 = vunpack.c.l.b16 %v385
    %v674 = vunpack.c.l.b16 %v386
    %v675 = vunpack.c.l.b16 %v387
    %v676 = vunpack.c.l.b16 %v388
    %v677 = vunpack.c.l.b16 %v389
    %v678 = vunpack.c.l.b16 %v390
    %v679 = vunpack.c.l.b16 %v391
    %v680 = vunpack.c.l.b16 %v392
    %v681 = vunpack.c.l.b16 %v393
    %v682 = vunpack.c.l.b16 %v394
    %v683 = vunpack.c.l.b16 %v395
    %v684 = vunpack.c.l.b16 %v396
    %v685 = vunpack.c.l.b16 %v397
    %v686 = vunpack.c.l.b16 %v398
    %v687 = vunpack.c.l.b16 %v399
    %v688 = vunpack.c.l.b16 %v400
    %v689 = vunpack.c.l.b16 %v401
    %v690 = vunpack.c.l.b16 %v402
    %v691 = vunpack.c.l.b16 %v403
    %v692 = vunpack.c.l.b16 %v404
    %v693 = vunpack.c.l.b16 %v405
    %v694 = vunpack.c.l.b16 %v406
    %v695 = vunpack.c.l.b16 %v407
    %v696 = vunpack.c.l.b16 %v408
    %v697 = vunpack.c.l.b16 %v409
    %v698 = vunpack.c.l.b16 %v410
    %v699 = vunpack.c.l.b16 %v411
    %v700 = vunpack.c.l.b16 %v412
    %v701 = vunpack.c.l.b16 %v413
    %v702 = vunpack.c.l.b16 %v414
    %v703 = vunpack.c.l.b16 %v415
    %v704 = vunpack.c.l.b16 %v416
    %v705 = vunpack.c.l.b16 %v417
    %v706 = vunpack.c.l.b16 %v418
    %v707 = vunpack.c.l.b16 %v419
    %v708 = vunpack.c.l.b16 %v420
    %v709 = vunpack.c.l.b16 %v421
    %v710 = vunpack.c.l.b16 %v422
    %v711 = vunpack.c.l.b16 %v423
    %v712 = vunpack.c.l.b16 %v424
    %v713 = vunpack.c.l.b16 %v425
    %v714 = vunpack.c.l.b16 %v426
    %v715 = vunpack.c.l.b16 %v427
    %v716 = vunpack.c.l.b16 %v428
    %v717 = vunpack.c.l.b16 %v429
    %v718 = vunpack.c.l.b16 %v430
    %v719 = vunpack.c.l.b16 %v431
    %v720 = vunpack.c.l.b16 %v432
    %v721 = vunpack.c.l.b16 %v433
    %v722 = vunpack.c.l.b16 %v434
    %v723 = vunpack.c.l.b16 %v435
    %v724 = vunpack.c.l.b16 %v436
    %v725 = vunpack.c.l.b16 %v437
    %v726 = vunpack.c.l.b16 %v438
    %v727 = vunpack.c.l.b16 %v439
    %v728 = vunpack.c.l.b16 %v440
    %v729 = vunpack.c.l.b16 %v441
    %v730 = vunpack.c.l.b16 %v442
    %v731 = vunpack.c.l.b16 %v443
    %v732 = vunpack.c.l.b16 %v444
    %v733 = vunpack.c.l.b16 %v445
    %v734 = vunpack.c.l.b16 %v446
    %v735 = vunpack.c.l.b16 %v447
    %v736 = vunpack.c.l.b16 %v448
    %v737 = vunpack.c.l.b16 %v449
    %v738 = vunpack.c.l.b16 %v450
    %v739 = vunpack.c.l.b16 %v451
    %v740 = vunpack.c.l.b16 %v452
    %v741 = vunpack.c.l.b16 %v453
    %v742 = vunpack.c.l.b16 %v454
    %v743 = vunpack.c.l.b16 %v455
    %v744 = vunpack.c.l.b16 %v456
    %v745 = vunpack.c.l.b16 %v457
    %v746 = vunpack.c.l.b16 %v458
    %v747 = vunpack.c.l.b16 %v459
    %v748 = vunpack.c.l.b16 %v460
    %v749 = vunpack.c.l.b16 %v461
    %v750 = vunpack.c.l.b16 %v462
    %v751 = vunpack.c.l.b16 %v463
    %v752 = vunpack.c.l.b16 %v464
    %v753 = vunpack.c.l.b16 %v465
    %v754 = vunpack.c.l.b16 %v466
    %v755 = vunpack.c.l.b16 %v467
    %v756 = vunpack.c.l.b16 %v468
    %v757 = vunpack.c.l.b16 %v469
    %v758 = vunpack.c.l.b16 %v470
    %v759 = vunpack.c.l.b16 %v471
    %v760 = vunpack.c.l.b16 %v472
    %v761 = vunpack.c.l.b16 %v473
    %v762 = vunpack.c.l.b16 %v474
    %v763 = vunpack.c.l.b16 %v475
    %v764 = vunpack.c.l.b16 %v476
    %v765 = vunpack.c.l.b16 %v477
    %v766 = vunpack.c.l.b16 %v478
    %v767 = vunpack.c.l.b16 %v479
    %v768 = vunpack.c.l.b16 %v480
    %v769 = vunpack.c.l.b16 %v481
    %v770 = vunpack.c.l.b16 %v482
    %v771 = vunpack.c.l.b16 %v483
    %v772 = vunpack.c.l.b16 %v484
    %v773 = vunpack.c.l.b16 %v485
    %v774 = vunpack.c.l.b16 %v486
    %v775 = vunpack.c.l.b16 %v487
    %v776 = vunpack.c.l.b16 %v488
    %v777 = vunpack.c.l.b16 %v489
    %v778 = vunpack.c.l.b16 %v490
    %v779 = vunpack.c.l.b16 %v491
    %v780 = vunpack.c.l.b16 %v492
    %v781 = vunpack.c.l.b16 %v493
    %v782 = vunpack.c.l.b16 %v494
    %v783 = vunpack.c.l.b16 %v495
    %v784 = vunpack.c.l.b16 %v496
    %v785 = vunpack.c.l.b16 %v497
    %v786 = vunpack.c.l.b16 %v498
    %v787 = vunpack.c.l.b16 %v499
    %v788 = vunpack.c.l.b16 %v500
    %v789 = vunpack.c.l.b16 %v501
    %v790 = vunpack.c.l.b16 %v502
    %v791 = vunpack.c.l.b16 %v503
    %v792 = vunpack.c.l.b16 %v504
    %v793 = vunpack.c.l.b16 %v505
    %v794 = vpack.c.b16 %v667, %v666
    %v795 = vpack.c.b16 %v669, %v668
    %v796 = vpack.c.b16 %v671, %v670
    %v797 = vpack.c.b16 %v673, %v672
    %v798 = vpack.c.b16 %v675, %v674
    %v799 = vpack.c.b16 %v677, %v676
    %v800 = vpack.c.b16 %v679, %v678
    %v801 = vpack.c.b16 %v681, %v680
    %v802 = vpack.c.b16 %v683, %v682
    %v803 = vpack.c.b16 %v685, %v684
    %v804 = vpack.c.b16 %v687, %v686
    %v805 = vpack.c.b16 %v689, %v688
    %v806 = vpack.c.b16 %v691, %v690
    %v807 = vpack.c.b16 %v693, %v692
    %v808 = vpack.c.b16 %v695, %v694
    %v809 = vpack.c.b16 %v697, %v696
    %v810 = vpack.c.b16 %v699, %v698
    %v811 = vpack.c.b16 %v701, %v700
    %v812 = vpack.c.b16 %v703, %v702
    %v813 = vpack.c.b16 %v705, %v704
    %v814 = vpack.c.b16 %v707, %v706
    %v815 = vpack.c.b16 %v709, %v708
    %v816 = vpack.c.b16 %v711, %v710
    %v817 = vpack.c.b16 %v713, %v712
    %v818 = vpack.c.b16 %v715, %v714
    %v819 = vpack.c.b16 %v717, %v716
    %v820 = vpack.c.b16 %v719, %v718
    %v821 = vpack.c.b16 %v721, %v720
    %v822 = vpack.c.b16 %v723, %v722
    %v823 = vpack.c.b16 %v725, %v724
    %v824 = vpack.c.b16 %v727, %v726
    %v825 = vpack.c.b16 %v729, %v728
    %v826 = vpack.c.b16 %v731, %v730
    %v827 = vpack.c.b16 %v733, %v732
    %v828 = vpack.c.b16 %v735, %v734
    %v829 = vpack.c.b16 %v737, %v736
    %v830 = vpack.c.b16 %v739, %v738
    %v831 = vpack.c.b16 %v741, %v740
    %v832 = vpack.c.b16 %v743, %v742
    %v833 = vpack.c.b16 %v745, %v744
    %v834 = vpack.c.b16 %v747, %v746
    %v835 = vpack.c.b16 %v749, %v748
    %v836 = vpack.c.b16 %v751, %v750
    %v837 = vpack.c.b16 %v753, %v752
    %v838 = vpack.c.b16 %v755, %v754
    %v839 = vpack.c.b16 %v757, %v756
    %v840 = vpack.c.b16 %v759, %v758
    %v841 = vpack.c.b16 %v761, %v760
    %v842 = vpack.c.b16 %v763, %v762
    %v843 = vpack.c.b16 %v765, %v764
    %v844 = vpack.c.b16 %v767, %v766
    %v845 = vpack.c.b16 %v769, %v768
    %v846 = vpack.c.b16 %v771, %v770
    %v847 = vpack.c.b16 %v773, %v772
    %v848 = vpack.c.b16 %v775, %v774
    %v849 = vpack.c.b16 %v777, %v776
    %v850 = vpack.c.b16 %v779, %v778
    %v851 = vpack.c.b16 %v781, %v780
    %v852 = vpack.c.b16 %v783, %v782
    %v853 = vpack.c.b16 %v785, %v784
    %v854 = vpack.c.b16 %v787, %v786
    %v855 = vpack.c.b16 %v789, %v788
    %v856 = vpack.c.b16 %v791, %v790
    %v857 = vpack.c.b16 %v793, %v792
    %922 = vmatpush.bf16.msra.mxu0 %v801
    %923 = vmatpush.bf16.msra.mxu0 %v800
    %924 = vmatpush.bf16.msra.mxu0 %v799
    %925 = vmatpush.bf16.msra.mxu0 %v798
    %926 = vmatpush.bf16.msra.mxu0 %v797
    %927 = vmatpush.bf16.msra.mxu0 %v796
    %928 = vmatpush.bf16.msra.mxu0 %v795
    %929 = vmatpush.bf16.msra.mxu0 %v794
    %930 = vmatmul.bf16.gmra.mxu0 %v522
    %v931 = vpop.f32.mrf.mxu0
    %v932 = vadd.f32 %v508, %v931
    %v933 = vpop.f32.mrf.mxu0
    %934 = vdwg.mxu0
    %935 = vmatpush.bf16.msra.mxu0 %v809
    %936 = vmatpush.bf16.msra.mxu0 %v808
    %937 = vmatpush.bf16.msra.mxu0 %v807
    %938 = vmatpush.bf16.msra.mxu0 %v806
    %939 = vmatpush.bf16.msra.mxu0 %v805
    %940 = vmatpush.bf16.msra.mxu0 %v804
    %941 = vmatpush.bf16.msra.mxu0 %v803
    %942 = vmatpush.bf16.msra.mxu0 %v802
    %943 = vmatmul.bf16.gmra.mxu0 %v523
    %v944 = vpop.f32.mrf.mxu0
    %v945 = vadd.f32 %v932, %v944
    %v946 = vpop.f32.mrf.mxu0
    %947 = vdwg.mxu0
    %948 = vmatpush.bf16.msra.mxu0 %v817
    %949 = vmatpush.bf16.msra.mxu0 %v816
    %950 = vmatpush.bf16.msra.mxu0 %v815
    %951 = vmatpush.bf16.msra.mxu0 %v814
    %952 = vmatpush.bf16.msra.mxu0 %v813
    %953 = vmatpush.bf16.msra.mxu0 %v812
    %954 = vmatpush.bf16.msra.mxu0 %v811
    %955 = vmatpush.bf16.msra.mxu0 %v810
    %956 = vmatmul.bf16.gmra.mxu0 %v524
    %v957 = vpop.f32.mrf.mxu0
    %v958 = vadd.f32 %v945, %v957
    %v959 = vpop.f32.mrf.mxu0
    %960 = vdwg.mxu0
    %961 = vmatpush.bf16.msra.mxu0 %v825
    %962 = vmatpush.bf16.msra.mxu0 %v824
    %963 = vmatpush.bf16.msra.mxu0 %v823
    %964 = vmatpush.bf16.msra.mxu0 %v822
    %965 = vmatpush.bf16.msra.mxu0 %v821
    %966 = vmatpush.bf16.msra.mxu0 %v820
    %967 = vmatpush.bf16.msra.mxu0 %v819
    %968 = vmatpush.bf16.msra.mxu0 %v818
    %969 = vmatmul.bf16.gmra.mxu0 %v525
    %v970 = vpop.f32.mrf.mxu0
    %v971 = vadd.f32 %v958, %v970
    %v972 = vpop.f32.mrf.mxu0
    %973 = vdwg.mxu0
    %974 = vmatpush.bf16.msra.mxu0 %v833
    %975 = vmatpush.bf16.msra.mxu0 %v832
    %976 = vmatpush.bf16.msra.mxu0 %v831
    %977 = vmatpush.bf16.msra.mxu0 %v830
    %978 = vmatpush.bf16.msra.mxu0 %v829
    %979 = vmatpush.bf16.msra.mxu0 %v828
    %980 = vmatpush.bf16.msra.mxu0 %v827
    %981 = vmatpush.bf16.msra.mxu0 %v826
    %982 = vmatmul.bf16.gmra.mxu0 %v526
    %v983 = vpop.f32.mrf.mxu0
    %v984 = vadd.f32 %v971, %v983
    %v985 = vpop.f32.mrf.mxu0
    %986 = vdwg.mxu0
    %987 = vmatpush.bf16.msra.mxu0 %v841
    %988 = vmatpush.bf16.msra.mxu0 %v840
    %989 = vmatpush.bf16.msra.mxu0 %v839
    %990 = vmatpush.bf16.msra.mxu0 %v838
    %991 = vmatpush.bf16.msra.mxu0 %v837
    %992 = vmatpush.bf16.msra.mxu0 %v836
    %993 = vmatpush.bf16.msra.mxu0 %v835
    %994 = vmatpush.bf16.msra.mxu0 %v834
    %995 = vmatmul.bf16.gmra.mxu0 %v527
    %v996 = vpop.f32.mrf.mxu0
    %v997 = vadd.f32 %v984, %v996
    %v998 = vpop.f32.mrf.mxu0
    %999 = vdwg.mxu0
    %1000 = vmatpush.bf16.msra.mxu0 %v849
    %1001 = vmatpush.bf16.msra.mxu0 %v848
    %1002 = vmatpush.bf16.msra.mxu0 %v847
    %1003 = vmatpush.bf16.msra.mxu0 %v846
    %1004 = vmatpush.bf16.msra.mxu0 %v845
    %1005 = vmatpush.bf16.msra.mxu0 %v844
    %1006 = vmatpush.bf16.msra.mxu0 %v843
    %1007 = vmatpush.bf16.msra.mxu0 %v842
    %1008 = vmatmul.bf16.gmra.mxu0 %v528
    %v1009 = vpop.f32.mrf.mxu0
    %v1010 = vadd.f32 %v997, %v1009
    %v1011 = vpop.f32.mrf.mxu0
    %1012 = vdwg.mxu0
    %1013 = vmatpush.bf16.msra.mxu0 %v857
    %1014 = vmatpush.bf16.msra.mxu0 %v856
    %1015 = vmatpush.bf16.msra.mxu0 %v855
    %1016 = vmatpush.bf16.msra.mxu0 %v854
    %1017 = vmatpush.bf16.msra.mxu0 %v853
    %1018 = vmatpush.bf16.msra.mxu0 %v852
    %1019 = vmatpush.bf16.msra.mxu0 %v851
    %1020 = vmatpush.bf16.msra.mxu0 %v850
    %1021 = vmatmul.bf16.gmra.mxu0 %v529
    %v1022 = vpop.f32.mrf.mxu0
    %v1023 = vadd.f32 %v1010, %v1022
    %v1024 = vpop.f32.mrf.mxu0
    %1025 = vdwg.mxu0
    %1026 = vst [vmem:[#allocation9] sm:$0xff] %v1023
    // Predicated region
    $region30: #{tpu_custom_call.1} parent=1 // pred_check
      _
    $region31: #{tpu_custom_call.1} parent=1 // pred_check_branch
      %1028 = sbr.rel (0) target = $region33
    $region32: #{tpu_custom_call.1} parent=1 // pred_region
      %1030 = vsyncadd [#allocation5], 0
      %s1032 = sshll.u32 [#allocation9], 4
      %s1033 = int_to_ptr.vmem [resolvable:$true] %s1032
      %s1034 = sshll.u32 %s4, 4
      %s1035 = int_to_ptr.hbm [resolvable:$true] %s1034
      %1037 = dma.vmem_to_hbm [thread:$0]  %s1033, 128, %s1035, [#allocation5]
    $region33: #{tpu_custom_call.1} parent=1 // pred_fallthru
      _
    // Predicated region
    $region34: #{tpu_custom_call.1} parent=1 // pred_check
      _
    $region35: #{tpu_custom_call.1} parent=1 // pred_check_branch
      %1039 = sbr.rel (0) target = $region37
    $region36: #{tpu_custom_call.1} parent=1 // pred_region
      %1041 = dma.done [#allocation5], 128
    $region37: #{tpu_custom_call.1} parent=1 // pred_fallthru
      _
    %1042 = vsyncpa [#allocation4], 1
    %1043 = vsyncpa [#allocation7], 1
    %1044 = vsyncpa [#allocation5], 1

</llo_original>
